<compile_context>
chip_gen: v6e
topology: v6e:2x2x1
jax: 0.10.0
libtpu: 0.0.40
codegen_flags: <defaults>
</compile_context>

<pallas_src>
import functools

import jax
import jax.numpy as jnp
from jax.experimental import pallas as pl
from jax.experimental.pallas import tpu as pltpu


def _round_up(x: int, m: int) -> int:
    return ((x + m - 1) // m) * m


def _soft_penalty_loss_kernel(pred_ref, tgt_ref, pen_ref, out_ref, *,
                              num_classes: int, mse_weight: float):
    # pred_ref, tgt_ref: (TILE_R, 128) f32 in VMEM (one grid block)
    # pen_ref:           (C, C)        f32 in SMEM (whole array, scalar reads)
    # out_ref:           (1, 8, 128)   f32 per-block partial sums
    preds = pred_ref[...]
    tgts = tgt_ref[...]
    c = num_classes

    clamped = jnp.clip(preds, jnp.float32(0.0), jnp.float32(c - 1))
    lower_f = jnp.floor(clamped)
    w_up = clamped - lower_f                       # weight_upper

    # targets.long() truncation (labels are non-negative class ids stored as
    # float); floor also absorbs tiny fp noise in float-encoded labels.
    tgt_cls = jnp.floor(tgts)

    # Pre-read all C*C penalty scalars from SMEM once (outside the selects).
    pen_vals = [[pen_ref[i, j] for j in range(c)] for i in range(c)]

    zeros = jnp.zeros_like(preds)

    # Stage 1: C row masks, then per-column planes p[j] = penalty[target, j].
    # Padded elements (target == C) match no row mask -> p[j] == 0 -> the
    # penalty term is exactly 0 for padding.
    # TODO(synk): out-of-range targets (<0 or >=C) contribute 0 penalty here,
    # whereas a clamping gather would not; training labels are always valid.
    row_mask = [tgt_cls == jnp.float32(i) for i in range(c)]
    p = []
    for j in range(c):
        pj = zeros
        for i in range(c):
            pj = jnp.where(row_mask[i], pen_vals[i][j], pj)
        p.append(pj)

    # Stage 2: C column compares shared by both outputs.  upper == lower + 1
    # except at the clamp boundary (lower == C-1), where w_up == 0 so the
    # clamped upper column is never actually weighted.
    pen_lo = zeros
    pen_up = zeros
    for j in range(c):
        cm = lower_f == jnp.float32(j)
        pen_lo = jnp.where(cm, p[j], pen_lo)
        pen_up = jnp.where(cm, p[min(j + 1, c - 1)], pen_up)

    diff = preds - tgts
    contrib = (pen_lo + w_up * (pen_up - pen_lo)
               + jnp.float32(mse_weight) * diff * diff)

    # Sublane-block partial sum (pure VALU adds): (TILE_R,128) -> (8,128).
    tile_rows = contrib.shape[0]
    partial = jnp.sum(contrib.reshape(tile_rows // 8, 8, 128), axis=0)
    out_ref[0] = partial


def soft_penalty_matrix_loss(predictions, targets, penalty_matrix,
                             mse_weight: float = 0.3,
                             max_tile_rows: int = 4096):
    """Pallas implementation of SoftPenaltyMatrixLoss.forward.

    predictions, targets: float arrays of identical (arbitrary) shape.
    penalty_matrix: (C, C) float array.
    Returns a scalar f32 loss.
    """
    num_classes = int(penalty_matrix.shape[0])
    n = int(predictions.size)
    assert n > 0
    # Fully unrolled trace-time gather: ops scale as C^2 + 4C per element.
    # TODO(synk): for C > 32 switch strategy (VMEM table + one-hot MXU gather).
    assert num_classes <= 32, "unrolled gather only supports small C"
    assert num_classes * num_classes + num_classes < (1 << 24)  # exact in f32

    pred_flat = predictions.reshape(-1).astype(jnp.float32)
    tgt_flat = targets.reshape(-1).astype(jnp.float32)
    pen = penalty_matrix.astype(jnp.float32)

    # Lane-dense (rows, 128) layout, row-tiled over a 1-D "parallel" grid.
    rows = -(-n // 128)
    rows8 = _round_up(rows, 8)
    max_tile_rows = max(8, _round_up(max_tile_rows, 8))
    num_blocks = max(1, -(-rows8 // max_tile_rows))
    if num_blocks == 1 and rows8 >= 16:
        num_blocks = 2          # v7x megacore: give both TensorCores a block
    tile_rows = _round_up(-(-rows8 // num_blocks), 8)
    padded_rows = num_blocks * tile_rows

    # Pad with fill=num_classes: padded elements contribute exactly 0 to both
    # terms (no row mask matches -> zero penalty; pred == target -> zero MSE).
    total = padded_rows * 128
    pad_amount = total - n
    fill = float(num_classes)
    if pad_amount:
        pred_flat = jnp.pad(pred_flat, (0, pad_amount), constant_values=fill)
        tgt_flat = jnp.pad(tgt_flat, (0, pad_amount), constant_values=fill)

    pred2d = pred_flat.reshape(padded_rows, 128)
    tgt2d = tgt_flat.reshape(padded_rows, 128)

    kernel = functools.partial(
        _soft_penalty_loss_kernel,
        num_classes=num_classes,
        mse_weight=float(mse_weight),
    )

    partials = pl.pallas_call(
        kernel,
        out_shape=jax.ShapeDtypeStruct((num_blocks, 8, 128), jnp.float32),
        grid=(num_blocks,),
        in_specs=[
            pl.BlockSpec((tile_rows, 128), lambda i: (i, 0)),   # predictions
            pl.BlockSpec((tile_rows, 128), lambda i: (i, 0)),   # targets
            pl.BlockSpec(memory_space=pltpu.MemorySpace.SMEM),  # penalty matrix
        ],
        out_specs=pl.BlockSpec((1, 8, 128), lambda i: (i, 0, 0)),
        compiler_params=pltpu.CompilerParams(
            dimension_semantics=("parallel",)),
    )(pred2d, tgt2d, pen)

    # Single cross-lane reduce + normalization (tiny) done once in the wrapper;
    # both means share the same element count n.
    return jnp.sum(partials) / jnp.float32(n)


def _reference_loss(predictions, targets, penalty_matrix, mse_weight=0.3):
    """Pure-JAX reference matching the PyTorch semantics."""
    C = penalty_matrix.shape[0]
    preds = predictions.astype(jnp.float32)
    tgts_f = targets.astype(jnp.float32)
    clamped = jnp.clip(preds, 0.0, C - 1.0)
    lower = jnp.floor(clamped).astype(jnp.int32)
    upper = jnp.ceil(clamped).astype(jnp.int32)
    w_up = clamped - lower.astype(jnp.float32)
    w_lo = 1.0 - w_up
    tcls = tgts_f.astype(jnp.int32)
    p_lo = penalty_matrix[tcls, lower]
    p_up = penalty_matrix[tcls, upper]
    penalty_loss = jnp.mean(w_lo * p_lo + w_up * p_up)
    mse = jnp.mean((preds - tgts_f) ** 2)
    return penalty_loss + mse_weight * mse


if __name__ == "__main__":
    key = jax.random.PRNGKey(0)
    k_pred, k_tgt = jax.random.split(key)

    num_classes = 5
    mse_weight = 0.3
    shape = (4, 250)  # 1000 elements -> exercises flatten + lane padding

    # Deterministic penalty matrix: |i - j| misranking cost.
    idx = jnp.arange(num_classes, dtype=jnp.float32)
    penalty_matrix = jnp.abs(idx[:, None] - idx[None, :])

    # Predictions: continuous scores (exercise clamping at both ends).
    predictions = jax.random.uniform(
        k_pred, shape, dtype=jnp.float32,
        minval=-0.5, maxval=num_classes - 0.5)
    # Targets: integer class labels stored as float (as in the training loop).
    targets = jax.random.randint(
        k_tgt, shape, 0, num_classes).astype(jnp.float32)

    loss = soft_penalty_matrix_loss(predictions, targets, penalty_matrix,
                                    mse_weight)
    loss = jax.block_until_ready(loss)

    ref = _reference_loss(predictions, targets, penalty_matrix, mse_weight)
    ref = jax.block_until_ready(ref)

    assert jnp.allclose(loss, ref, rtol=1e-5, atol=1e-5), (loss, ref)
    print("KERNEL_OK")
</pallas_src>

<mosaic_0001>
module attributes {stable_mosaic.version = 11 : i64} {
  func.func @_soft_penalty_loss_kernel(%arg0: i32, %arg1: memref<8x128xf32, #tpu.memory_space<vmem>>, %arg2: memref<8x128xf32, #tpu.memory_space<vmem>>, %arg3: memref<5x5xf32, #tpu.memory_space<smem>>, %arg4: memref<1x8x128xf32, #tpu.memory_space<vmem>>) attributes {dimension_semantics = [#tpu.dimension_semantics<parallel>], iteration_bounds = array<i64: 1>, scalar_prefetch = 0 : i64, scratch_operands = 0 : i64, tpu.core_type = #tpu.core_type<tc>, window_params = [{transform_indices = @transform_0, window_bounds = array<i64: 8, 128>}, {transform_indices = @transform_1, window_bounds = array<i64: 8, 128>}, {transform_indices = @transform_2, window_bounds = array<i64: 5, 5>}, {transform_indices = @transform_3, window_bounds = array<i64: 1, 8, 128>}]} {
    %c0 = arith.constant 0 : index
    %c0_0 = arith.constant 0 : index
    %0 = vector.load %arg1[%c0, %c0_0] : memref<8x128xf32, #tpu.memory_space<vmem>>, vector<8x128xf32>
    %c0_1 = arith.constant 0 : index
    %c0_2 = arith.constant 0 : index
    %1 = vector.load %arg2[%c0_1, %c0_2] : memref<8x128xf32, #tpu.memory_space<vmem>>, vector<8x128xf32>
    %cst = arith.constant 0.000000e+00 : f32
    %cst_3 = arith.constant 4.000000e+00 : f32
    %2 = vector.broadcast %cst : f32 to vector<8x128xf32>
    %3 = arith.maximumf %2, %0 : vector<8x128xf32>
    %4 = vector.broadcast %cst_3 : f32 to vector<8x128xf32>
    %5 = arith.minimumf %4, %3 : vector<8x128xf32>
    %6 = math.floor %5 : vector<8x128xf32>
    %7 = arith.subf %5, %6 : vector<8x128xf32>
    %8 = math.floor %1 : vector<8x128xf32>
    %c0_4 = arith.constant 0 : index
    %c0_5 = arith.constant 0 : index
    %9 = memref.load %arg3[%c0_4, %c0_5] : memref<5x5xf32, #tpu.memory_space<smem>>
    %c0_6 = arith.constant 0 : index
    %c1 = arith.constant 1 : index
    %10 = memref.load %arg3[%c0_6, %c1] : memref<5x5xf32, #tpu.memory_space<smem>>
    %c0_7 = arith.constant 0 : index
    %c2 = arith.constant 2 : index
    %11 = memref.load %arg3[%c0_7, %c2] : memref<5x5xf32, #tpu.memory_space<smem>>
    %c0_8 = arith.constant 0 : index
    %c3 = arith.constant 3 : index
    %12 = memref.load %arg3[%c0_8, %c3] : memref<5x5xf32, #tpu.memory_space<smem>>
    %c0_9 = arith.constant 0 : index
    %c4 = arith.constant 4 : index
    %13 = memref.load %arg3[%c0_9, %c4] : memref<5x5xf32, #tpu.memory_space<smem>>
    %c1_10 = arith.constant 1 : index
    %c0_11 = arith.constant 0 : index
    %14 = memref.load %arg3[%c1_10, %c0_11] : memref<5x5xf32, #tpu.memory_space<smem>>
    %c1_12 = arith.constant 1 : index
    %c1_13 = arith.constant 1 : index
    %15 = memref.load %arg3[%c1_12, %c1_13] : memref<5x5xf32, #tpu.memory_space<smem>>
    %c1_14 = arith.constant 1 : index
    %c2_15 = arith.constant 2 : index
    %16 = memref.load %arg3[%c1_14, %c2_15] : memref<5x5xf32, #tpu.memory_space<smem>>
    %c1_16 = arith.constant 1 : index
    %c3_17 = arith.constant 3 : index
    %17 = memref.load %arg3[%c1_16, %c3_17] : memref<5x5xf32, #tpu.memory_space<smem>>
    %c1_18 = arith.constant 1 : index
    %c4_19 = arith.constant 4 : index
    %18 = memref.load %arg3[%c1_18, %c4_19] : memref<5x5xf32, #tpu.memory_space<smem>>
    %c2_20 = arith.constant 2 : index
    %c0_21 = arith.constant 0 : index
    %19 = memref.load %arg3[%c2_20, %c0_21] : memref<5x5xf32, #tpu.memory_space<smem>>
    %c2_22 = arith.constant 2 : index
    %c1_23 = arith.constant 1 : index
    %20 = memref.load %arg3[%c2_22, %c1_23] : memref<5x5xf32, #tpu.memory_space<smem>>
    %c2_24 = arith.constant 2 : index
    %c2_25 = arith.constant 2 : index
    %21 = memref.load %arg3[%c2_24, %c2_25] : memref<5x5xf32, #tpu.memory_space<smem>>
    %c2_26 = arith.constant 2 : index
    %c3_27 = arith.constant 3 : index
    %22 = memref.load %arg3[%c2_26, %c3_27] : memref<5x5xf32, #tpu.memory_space<smem>>
    %c2_28 = arith.constant 2 : index
    %c4_29 = arith.constant 4 : index
    %23 = memref.load %arg3[%c2_28, %c4_29] : memref<5x5xf32, #tpu.memory_space<smem>>
    %c3_30 = arith.constant 3 : index
    %c0_31 = arith.constant 0 : index
    %24 = memref.load %arg3[%c3_30, %c0_31] : memref<5x5xf32, #tpu.memory_space<smem>>
    %c3_32 = arith.constant 3 : index
    %c1_33 = arith.constant 1 : index
    %25 = memref.load %arg3[%c3_32, %c1_33] : memref<5x5xf32, #tpu.memory_space<smem>>
    %c3_34 = arith.constant 3 : index
    %c2_35 = arith.constant 2 : index
    %26 = memref.load %arg3[%c3_34, %c2_35] : memref<5x5xf32, #tpu.memory_space<smem>>
    %c3_36 = arith.constant 3 : index
    %c3_37 = arith.constant 3 : index
    %27 = memref.load %arg3[%c3_36, %c3_37] : memref<5x5xf32, #tpu.memory_space<smem>>
    %c3_38 = arith.constant 3 : index
    %c4_39 = arith.constant 4 : index
    %28 = memref.load %arg3[%c3_38, %c4_39] : memref<5x5xf32, #tpu.memory_space<smem>>
    %c4_40 = arith.constant 4 : index
    %c0_41 = arith.constant 0 : index
    %29 = memref.load %arg3[%c4_40, %c0_41] : memref<5x5xf32, #tpu.memory_space<smem>>
    %c4_42 = arith.constant 4 : index
    %c1_43 = arith.constant 1 : index
    %30 = memref.load %arg3[%c4_42, %c1_43] : memref<5x5xf32, #tpu.memory_space<smem>>
    %c4_44 = arith.constant 4 : index
    %c2_45 = arith.constant 2 : index
    %31 = memref.load %arg3[%c4_44, %c2_45] : memref<5x5xf32, #tpu.memory_space<smem>>
    %c4_46 = arith.constant 4 : index
    %c3_47 = arith.constant 3 : index
    %32 = memref.load %arg3[%c4_46, %c3_47] : memref<5x5xf32, #tpu.memory_space<smem>>
    %c4_48 = arith.constant 4 : index
    %c4_49 = arith.constant 4 : index
    %33 = memref.load %arg3[%c4_48, %c4_49] : memref<5x5xf32, #tpu.memory_space<smem>>
    %cst_50 = arith.constant 0.000000e+00 : f32
    %34 = vector.broadcast %cst_50 : f32 to vector<8x128xf32>
    %cst_51 = arith.constant 0.000000e+00 : f32
    %35 = vector.broadcast %cst_51 : f32 to vector<8x128xf32>
    %36 = arith.cmpf oeq, %8, %35 : vector<8x128xf32>
    %cst_52 = arith.constant 1.000000e+00 : f32
    %37 = vector.broadcast %cst_52 : f32 to vector<8x128xf32>
    %38 = arith.cmpf oeq, %8, %37 : vector<8x128xf32>
    %cst_53 = arith.constant 2.000000e+00 : f32
    %39 = vector.broadcast %cst_53 : f32 to vector<8x128xf32>
    %40 = arith.cmpf oeq, %8, %39 : vector<8x128xf32>
    %cst_54 = arith.constant 3.000000e+00 : f32
    %41 = vector.broadcast %cst_54 : f32 to vector<8x128xf32>
    %42 = arith.cmpf oeq, %8, %41 : vector<8x128xf32>
    %cst_55 = arith.constant 4.000000e+00 : f32
    %43 = vector.broadcast %cst_55 : f32 to vector<8x128xf32>
    %44 = arith.cmpf oeq, %8, %43 : vector<8x128xf32>
    %45 = vector.broadcast %9 : f32 to vector<8x128xf32>
    %46 = arith.select %36, %45, %34 : vector<8x128xi1>, vector<8x128xf32>
    %47 = vector.broadcast %14 : f32 to vector<8x128xf32>
    %48 = arith.select %38, %47, %46 : vector<8x128xi1>, vector<8x128xf32>
    %49 = vector.broadcast %19 : f32 to vector<8x128xf32>
    %50 = arith.select %40, %49, %48 : vector<8x128xi1>, vector<8x128xf32>
    %51 = vector.broadcast %24 : f32 to vector<8x128xf32>
    %52 = arith.select %42, %51, %50 : vector<8x128xi1>, vector<8x128xf32>
    %53 = vector.broadcast %29 : f32 to vector<8x128xf32>
    %54 = arith.select %44, %53, %52 : vector<8x128xi1>, vector<8x128xf32>
    %55 = vector.broadcast %10 : f32 to vector<8x128xf32>
    %56 = arith.select %36, %55, %34 : vector<8x128xi1>, vector<8x128xf32>
    %57 = vector.broadcast %15 : f32 to vector<8x128xf32>
    %58 = arith.select %38, %57, %56 : vector<8x128xi1>, vector<8x128xf32>
    %59 = vector.broadcast %20 : f32 to vector<8x128xf32>
    %60 = arith.select %40, %59, %58 : vector<8x128xi1>, vector<8x128xf32>
    %61 = vector.broadcast %25 : f32 to vector<8x128xf32>
    %62 = arith.select %42, %61, %60 : vector<8x128xi1>, vector<8x128xf32>
    %63 = vector.broadcast %30 : f32 to vector<8x128xf32>
    %64 = arith.select %44, %63, %62 : vector<8x128xi1>, vector<8x128xf32>
    %65 = vector.broadcast %11 : f32 to vector<8x128xf32>
    %66 = arith.select %36, %65, %34 : vector<8x128xi1>, vector<8x128xf32>
    %67 = vector.broadcast %16 : f32 to vector<8x128xf32>
    %68 = arith.select %38, %67, %66 : vector<8x128xi1>, vector<8x128xf32>
    %69 = vector.broadcast %21 : f32 to vector<8x128xf32>
    %70 = arith.select %40, %69, %68 : vector<8x128xi1>, vector<8x128xf32>
    %71 = vector.broadcast %26 : f32 to vector<8x128xf32>
    %72 = arith.select %42, %71, %70 : vector<8x128xi1>, vector<8x128xf32>
    %73 = vector.broadcast %31 : f32 to vector<8x128xf32>
    %74 = arith.select %44, %73, %72 : vector<8x128xi1>, vector<8x128xf32>
    %75 = vector.broadcast %12 : f32 to vector<8x128xf32>
    %76 = arith.select %36, %75, %34 : vector<8x128xi1>, vector<8x128xf32>
    %77 = vector.broadcast %17 : f32 to vector<8x128xf32>
    %78 = arith.select %38, %77, %76 : vector<8x128xi1>, vector<8x128xf32>
    %79 = vector.broadcast %22 : f32 to vector<8x128xf32>
    %80 = arith.select %40, %79, %78 : vector<8x128xi1>, vector<8x128xf32>
    %81 = vector.broadcast %27 : f32 to vector<8x128xf32>
    %82 = arith.select %42, %81, %80 : vector<8x128xi1>, vector<8x128xf32>
    %83 = vector.broadcast %32 : f32 to vector<8x128xf32>
    %84 = arith.select %44, %83, %82 : vector<8x128xi1>, vector<8x128xf32>
    %85 = vector.broadcast %13 : f32 to vector<8x128xf32>
    %86 = arith.select %36, %85, %34 : vector<8x128xi1>, vector<8x128xf32>
    %87 = vector.broadcast %18 : f32 to vector<8x128xf32>
    %88 = arith.select %38, %87, %86 : vector<8x128xi1>, vector<8x128xf32>
    %89 = vector.broadcast %23 : f32 to vector<8x128xf32>
    %90 = arith.select %40, %89, %88 : vector<8x128xi1>, vector<8x128xf32>
    %91 = vector.broadcast %28 : f32 to vector<8x128xf32>
    %92 = arith.select %42, %91, %90 : vector<8x128xi1>, vector<8x128xf32>
    %93 = vector.broadcast %33 : f32 to vector<8x128xf32>
    %94 = arith.select %44, %93, %92 : vector<8x128xi1>, vector<8x128xf32>
    %cst_56 = arith.constant 0.000000e+00 : f32
    %95 = vector.broadcast %cst_56 : f32 to vector<8x128xf32>
    %96 = arith.cmpf oeq, %6, %95 : vector<8x128xf32>
    %97 = arith.select %96, %54, %34 : vector<8x128xi1>, vector<8x128xf32>
    %98 = arith.select %96, %64, %34 : vector<8x128xi1>, vector<8x128xf32>
    %cst_57 = arith.constant 1.000000e+00 : f32
    %99 = vector.broadcast %cst_57 : f32 to vector<8x128xf32>
    %100 = arith.cmpf oeq, %6, %99 : vector<8x128xf32>
    %101 = arith.select %100, %64, %97 : vector<8x128xi1>, vector<8x128xf32>
    %102 = arith.select %100, %74, %98 : vector<8x128xi1>, vector<8x128xf32>
    %cst_58 = arith.constant 2.000000e+00 : f32
    %103 = vector.broadcast %cst_58 : f32 to vector<8x128xf32>
    %104 = arith.cmpf oeq, %6, %103 : vector<8x128xf32>
    %105 = arith.select %104, %74, %101 : vector<8x128xi1>, vector<8x128xf32>
    %106 = arith.select %104, %84, %102 : vector<8x128xi1>, vector<8x128xf32>
    %cst_59 = arith.constant 3.000000e+00 : f32
    %107 = vector.broadcast %cst_59 : f32 to vector<8x128xf32>
    %108 = arith.cmpf oeq, %6, %107 : vector<8x128xf32>
    %109 = arith.select %108, %84, %105 : vector<8x128xi1>, vector<8x128xf32>
    %110 = arith.select %108, %94, %106 : vector<8x128xi1>, vector<8x128xf32>
    %cst_60 = arith.constant 4.000000e+00 : f32
    %111 = vector.broadcast %cst_60 : f32 to vector<8x128xf32>
    %112 = arith.cmpf oeq, %6, %111 : vector<8x128xf32>
    %113 = arith.select %112, %94, %109 : vector<8x128xi1>, vector<8x128xf32>
    %114 = arith.select %112, %94, %110 : vector<8x128xi1>, vector<8x128xf32>
    %115 = arith.subf %0, %1 : vector<8x128xf32>
    %116 = arith.subf %114, %113 : vector<8x128xf32>
    %117 = arith.mulf %7, %116 : vector<8x128xf32>
    %118 = arith.addf %113, %117 : vector<8x128xf32>
    %cst_61 = arith.constant 3.000000e-01 : f32
    %119 = vector.broadcast %cst_61 : f32 to vector<8x128xf32>
    %120 = arith.mulf %119, %115 : vector<8x128xf32>
    %121 = arith.mulf %120, %115 : vector<8x128xf32>
    %122 = arith.addf %118, %121 : vector<8x128xf32>
    %123 = vector.shape_cast %122 : vector<8x128xf32> to vector<1x8x128xf32>
    %cst_62 = arith.constant dense<0.000000e+00> : vector<8x128xf32>
    %124 = vector.multi_reduction <add>, %123, %cst_62 [0] : vector<1x8x128xf32> to vector<8x128xf32>
    %c0_63 = arith.constant 0 : index
    %c0_64 = arith.constant 0 : index
    %c0_65 = arith.constant 0 : index
    %125 = vector.load %arg4[%c0_63, %c0_64, %c0_65] : memref<1x8x128xf32, #tpu.memory_space<vmem>>, vector<1x8x128xf32>
    %126 = vector.shape_cast %125 : vector<1x8x128xf32> to vector<8x128xf32>
    %127 = vector.shape_cast %124 : vector<8x128xf32> to vector<1x8x128xf32>
    tpu.vector_store %arg4[%c0_63, %c0_64, %c0_65], %127 {strides = array<i32>} : memref<1x8x128xf32, #tpu.memory_space<vmem>>, vector<1x8x128xf32>,
    return
  }
  func.func @transform_0(%arg0: i32) -> (i32, i32) {
    %c0_i32 = arith.constant 0 : i32
    %c0_i32_0 = arith.constant 0 : i32
    return %arg0, %c0_i32 : i32, i32
  }
  func.func @transform_1(%arg0: i32) -> (i32, i32) {
    %c0_i32 = arith.constant 0 : i32
    %c0_i32_0 = arith.constant 0 : i32
    return %arg0, %c0_i32 : i32, i32
  }
  func.func @transform_2(%arg0: i32) -> (i32, i32) {
    %c0_i32 = arith.constant 0 : i32
    %c0_i32_0 = arith.constant 0 : i32
    %c0_i32_1 = arith.constant 0 : i32
    return %c0_i32, %c0_i32_0 : i32, i32
  }
  func.func @transform_3(%arg0: i32) -> (i32, i32, i32) {
    %c0_i32 = arith.constant 0 : i32
    %c0_i32_0 = arith.constant 0 : i32
    %c0_i32_1 = arith.constant 0 : i32
    return %arg0, %c0_i32, %c0_i32_0 : i32, i32, i32
  }
}

</mosaic_0001>

<llo_original>
// kernel: tpu_custom_call.1
$region0: #{tpu_custom_call.1}
  #allocation0 [shape = 'u32[]', space=smem, size = 0x4, offset = 0x4, fixed_abs, tag = 'smem constant byte address 0x4 - core index']
  #allocation1 [shape = 'u32[144,128]{1,0:T(1,128)}', space=vmem, size = 0x12000, scoped, tag = 'internal scratch']
  %s0 = inlined_call_operand.hbm [shape: f32[8,128], index: 0, kind: input, shape index: {}]
  %s1 = inlined_call_operand.hbm [shape: f32[8,128], index: 1, kind: input, shape index: {}]
  %s2 = inlined_call_operand.hbm [shape: f32[5,5], index: 2, kind: input, shape index: {}]
  %s3 = inlined_call_operand.hbm [shape: f32[1,8,128], index: 3, kind: output, shape index: {}]
  %s4 = sld [smem:[#allocation0]]
  $region34: #{tpu_custom_call.1} parent=0
    _
  %s6 = ssub.s32 1, %s4
  %s7 = scalar_select 0, %s6, %s4
  $region1: #{tpu_custom_call.1} parent=0
    #allocation2 [shape = 'u8[4096]{0}', space=vmem, size = 0x1000, scoped, tag = 'input window, operand 0, single buffered']
    #allocation3 [shape = 's32[1]{0}', space=sflag, size = 0x4, scoped, tag = 'scoped memory for tpu_custom_call.1']
    #allocation4 [shape = 's32[1]{0}', space=sflag, size = 0x4, scoped, tag = 'scoped memory for tpu_custom_call.1']
    #allocation5 [shape = 's32[1]{0}', space=sflag, size = 0x4, scoped, tag = 'scoped memory for tpu_custom_call.1']
    #allocation6 [shape = 'u8[4096]{0}', space=vmem, size = 0x1000, scoped, tag = 'input window, operand 1, single buffered']
    #allocation7 [shape = 's32[1]{0}', space=sflag, size = 0x4, scoped, tag = 'scoped memory for tpu_custom_call.1']
    #allocation8 [shape = 'u8[4096]{0}', space=smem, size = 0x1000, scoped, tag = 'input window, operand 2, single buffered']
    #allocation9 [shape = 'u8[4096]{0}', space=vmem, size = 0x1000, scoped, tag = 'output window, operand 0, single buffered']
    %8 = vsyncpa [#allocation3], 0
    %9 = vsyncpa [#allocation7], 0
    %10 = vsyncpa [#allocation5], 0
    %11 = vsyncpa [#allocation4], 0
    // Predicated region
    $region2: #{tpu_custom_call.1} parent=1 // pred_check
      _
    $region3: #{tpu_custom_call.1} parent=1 // pred_check_branch
      %13 = sbr.rel (0) target = $region5
    $region4: #{tpu_custom_call.1} parent=1 // pred_region
      %s15 = ssub.s32 128, 128
      %16 = vsyncadd [#allocation3], %s15
      %s18 = sshll.u32 [#allocation2], 4
      %s19 = int_to_ptr.vmem [resolvable:$true] %s18
      %21 = dma.hbm_to_vmem [thread:$0]  %s0, 128, %s19, [#allocation3]
    $region5: #{tpu_custom_call.1} parent=1 // pred_fallthru
      _
    // Predicated region
    $region6: #{tpu_custom_call.1} parent=1 // pred_check
      _
    $region7: #{tpu_custom_call.1} parent=1 // pred_check_branch
      %23 = sbr.rel (0) target = $region9
    $region8: #{tpu_custom_call.1} parent=1 // pred_region
      %s25 = ssub.s32 128, 128
      %26 = vsyncadd [#allocation7], %s25
      %s28 = sshll.u32 [#allocation6], 4
      %s29 = int_to_ptr.vmem [resolvable:$true] %s28
      %31 = dma.hbm_to_vmem [thread:$0]  %s1, 128, %s29, [#allocation7]
    $region9: #{tpu_custom_call.1} parent=1 // pred_fallthru
      _
    // Predicated region
    $region10: #{tpu_custom_call.1} parent=1 // pred_check
      _
    $region11: #{tpu_custom_call.1} parent=1 // pred_check_branch
      %33 = sbr.rel (0) target = $region13
    $region12: #{tpu_custom_call.1} parent=1 // pred_region
      %s35 = ssub.s32 128, 128
      %36 = vsyncadd [#allocation5], %s35
      %39 = dma.hbm_to_smem %s2, 128, [#allocation8], [#allocation5]
    $region13: #{tpu_custom_call.1} parent=1 // pred_fallthru
      _
    // Predicated region
    $region14: #{tpu_custom_call.1} parent=1 // pred_check
      _
    $region15: #{tpu_custom_call.1} parent=1 // pred_check_branch
      %41 = sbr.rel (0) target = $region17
    $region16: #{tpu_custom_call.1} parent=1 // pred_region
      %42 = dma.done [#allocation3], 128
    $region17: #{tpu_custom_call.1} parent=1 // pred_fallthru
      _
    // Predicated region
    $region18: #{tpu_custom_call.1} parent=1 // pred_check
      _
    $region19: #{tpu_custom_call.1} parent=1 // pred_check_branch
      %44 = sbr.rel (0) target = $region21
    $region20: #{tpu_custom_call.1} parent=1 // pred_region
      %45 = dma.done [#allocation7], 128
    $region21: #{tpu_custom_call.1} parent=1 // pred_fallthru
      _
    // Predicated region
    $region22: #{tpu_custom_call.1} parent=1 // pred_check
      _
    $region23: #{tpu_custom_call.1} parent=1 // pred_check_branch
      %47 = sbr.rel (0) target = $region25
    $region24: #{tpu_custom_call.1} parent=1 // pred_region
      %48 = dma.done [#allocation5], 128
    $region25: #{tpu_custom_call.1} parent=1 // pred_fallthru
      _
    %49 = sfence
    %v50 = vld [vmem:[#allocation2] sm:$0xff]
    %v51 = vld [vmem:[#allocation6] sm:$0xff]
    %v52 = vmax.f32 %v50, 0.0
    %v53 = vmin.f32 %v52, 4.0
    %v54 = vfloor.f32 %v53
    %v55 = vsub.f32 %v53, %v54
    %v56 = vfloor.f32 %v51
    %s57 = sld [smem:[#allocation8]]
    %s58 = sld [smem:[#allocation8 + $0x1]]
    %s59 = sld [smem:[#allocation8 + $0x2]]
    %s60 = sld [smem:[#allocation8 + $0x3]]
    %s61 = sld [smem:[#allocation8 + $0x4]]
    %s62 = sld [smem:[#allocation8 + $0x80]]
    %s63 = sld [smem:[#allocation8 + $0x81]]
    %s64 = sld [smem:[#allocation8 + $0x82]]
    %s65 = sld [smem:[#allocation8 + $0x83]]
    %s66 = sld [smem:[#allocation8 + $0x84]]
    %s67 = sld [smem:[#allocation8 + $0x100]]
    %s68 = sld [smem:[#allocation8 + $0x101]]
    %s69 = sld [smem:[#allocation8 + $0x102]]
    %s70 = sld [smem:[#allocation8 + $0x103]]
    %s71 = sld [smem:[#allocation8 + $0x104]]
    %s72 = sld [smem:[#allocation8 + $0x180]]
    %s73 = sld [smem:[#allocation8 + $0x181]]
    %s74 = sld [smem:[#allocation8 + $0x182]]
    %s75 = sld [smem:[#allocation8 + $0x183]]
    %s76 = sld [smem:[#allocation8 + $0x184]]
    %s77 = sld [smem:[#allocation8 + $0x200]]
    %s78 = sld [smem:[#allocation8 + $0x201]]
    %s79 = sld [smem:[#allocation8 + $0x202]]
    %s80 = sld [smem:[#allocation8 + $0x203]]
    %s81 = sld [smem:[#allocation8 + $0x204]]
    %vm82 = vcmp.eq.f32.partialorder %v56, 0.0
    %vm83 = vcmp.eq.f32.partialorder %v56, 1.0
    %vm84 = vcmp.eq.f32.partialorder %v56, 2.0
    %vm85 = vcmp.eq.f32.partialorder %v56, 3.0
    %vm86 = vcmp.eq.f32.partialorder %v56, 4.0
    %v87 = vstv %s57
    %v88 = vsel %vm82, %v87, 0.0
    %v89 = vstv %s62
    %v90 = vsel %vm83, %v89, %v88
    %v91 = vstv %s67
    %v92 = vsel %vm84, %v91, %v90
    %v93 = vstv %s72
    %v94 = vsel %vm85, %v93, %v92
    %v95 = vstv %s77
    %v96 = vsel %vm86, %v95, %v94
    %v97 = vstv %s58
    %v98 = vsel %vm82, %v97, 0.0
    %v99 = vstv %s63
    %v100 = vsel %vm83, %v99, %v98
    %v101 = vstv %s68
    %v102 = vsel %vm84, %v101, %v100
    %v103 = vstv %s73
    %v104 = vsel %vm85, %v103, %v102
    %v105 = vstv %s78
    %v106 = vsel %vm86, %v105, %v104
    %v107 = vstv %s59
    %v108 = vsel %vm82, %v107, 0.0
    %v109 = vstv %s64
    %v110 = vsel %vm83, %v109, %v108
    %v111 = vstv %s69
    %v112 = vsel %vm84, %v111, %v110
    %v113 = vstv %s74
    %v114 = vsel %vm85, %v113, %v112
    %v115 = vstv %s79
    %v116 = vsel %vm86, %v115, %v114
    %v117 = vstv %s60
    %v118 = vsel %vm82, %v117, 0.0
    %v119 = vstv %s65
    %v120 = vsel %vm83, %v119, %v118
    %v121 = vstv %s70
    %v122 = vsel %vm84, %v121, %v120
    %v123 = vstv %s75
    %v124 = vsel %vm85, %v123, %v122
    %v125 = vstv %s80
    %v126 = vsel %vm86, %v125, %v124
    %v127 = vstv %s61
    %v128 = vsel %vm82, %v127, 0.0
    %v129 = vstv %s66
    %v130 = vsel %vm83, %v129, %v128
    %v131 = vstv %s71
    %v132 = vsel %vm84, %v131, %v130
    %v133 = vstv %s76
    %v134 = vsel %vm85, %v133, %v132
    %v135 = vstv %s81
    %v136 = vsel %vm86, %v135, %v134
    %vm137 = vcmp.eq.f32.partialorder %v54, 0.0
    %v138 = vsel %vm137, %v96, 0.0
    %v139 = vsel %vm137, %v106, 0.0
    %vm140 = vcmp.eq.f32.partialorder %v54, 1.0
    %v141 = vsel %vm140, %v106, %v138
    %v142 = vsel %vm140, %v116, %v139
    %vm143 = vcmp.eq.f32.partialorder %v54, 2.0
    %v144 = vsel %vm143, %v116, %v141
    %v145 = vsel %vm143, %v126, %v142
    %vm146 = vcmp.eq.f32.partialorder %v54, 3.0
    %v147 = vsel %vm146, %v126, %v144
    %v148 = vsel %vm146, %v136, %v145
    %vm149 = vcmp.eq.f32.partialorder %v54, 4.0
    %v150 = vsel %vm149, %v136, %v147
    %v151 = vsel %vm149, %v136, %v148
    %v152 = vsub.f32 %v50, %v51
    %v153 = vsub.f32 %v151, %v150
    %v154 = vmul.f32 %v55, %v153
    %v155 = vadd.f32 %v150, %v154
    %v156 = vmul.f32 %v152, 0.3
    %v157 = vmul.f32 %v156, %v152
    %v158 = vadd.f32 %v155, %v157
    %v159 = vadd.f32 %v158, 0.0
    %160 = vst [vmem:[#allocation9] sm:$0xff] %v159
    // Predicated region
    $region26: #{tpu_custom_call.1} parent=1 // pred_check
      _
    $region27: #{tpu_custom_call.1} parent=1 // pred_check_branch
      %162 = sbr.rel (0) target = $region29
    $region28: #{tpu_custom_call.1} parent=1 // pred_region
      %s164 = ssub.s32 128, 128
      %165 = vsyncadd [#allocation4], %s164
      %s167 = sshll.u32 [#allocation9], 4
      %s168 = int_to_ptr.vmem [resolvable:$true] %s167
      %170 = dma.vmem_to_hbm [thread:$0]  %s168, 128, %s3, [#allocation4]
    $region29: #{tpu_custom_call.1} parent=1 // pred_fallthru
      _
    // Predicated region
    $region30: #{tpu_custom_call.1} parent=1 // pred_check
      _
    $region31: #{tpu_custom_call.1} parent=1 // pred_check_branch
      %172 = sbr.rel (0) target = $region33
    $region32: #{tpu_custom_call.1} parent=1 // pred_region
      %173 = dma.done [#allocation4], 128
    $region33: #{tpu_custom_call.1} parent=1 // pred_fallthru
      _
    %174 = vsyncpa [#allocation3], 1
    %175 = vsyncpa [#allocation7], 1
    %176 = vsyncpa [#allocation4], 1
    %177 = vsyncpa [#allocation5], 1

</llo_original>
